<compile_context>
chip_gen: v5e
topology: v5e:2x2
jax: 0.10.0
libtpu: 0.0.40
codegen_flags: <defaults>
</compile_context>

<pallas_src>
import math
import functools

import jax
import jax.numpy as jnp
from jax import lax
from jax.experimental import pallas as pl
from jax.experimental.pallas import tpu as pltpu


_LANE = 128
_TARGET_SLAB_BYTES = 3 << 19       # ~1.5 MiB target for one (C, TILE) slab
_TARGET_BLOCK_BYTES = 1 << 20      # ~1 MiB target for one (NB, C, TILE) block
_NB_MAX = 8                        # max batch samples merged into one block (static unroll)
_MIN_TOTAL_STEPS = 8               # >= 3-4 pipeline steps per TensorCore (2 TCs on v7x)
_MIN_FORCED_TILE = 512             # never shrink lane tiles below this just to add steps


def _cdiv(a, b):
    return -(-a // b)


def _round_up(x, m):
    return _cdiv(x, m) * m


def _vmem_params():
    """Generation-aware VMEM budget (blocks + temps) and scoped vmem_limit_bytes."""
    try:
        cap = int(pltpu.get_tpu_info().vmem_capacity_bytes)
    except Exception:
        cap = 64 * 1024 * 1024      # conservative: v7x has the smallest VMEM (64 MiB)
    cap = max(cap, 32 * 1024 * 1024)
    budget = (cap * 3) // 8         # 24 MiB on v7x, 48 MiB on v5e/v6e
    limit = (cap * 5) // 8          # 40 MiB on v7x, 80 MiB on v5e/v6e
    return budget, limit


def _lane_tile(HW, C, N, io_bytes, w_bytes, budget):
    """Pick the lane (last-dim) tile: balanced 128-multiples, byte-targeted, >=8 steps."""
    hw128 = _round_up(HW, _LANE)
    # VMEM-budget cap: double-buffered in/out blocks + f32/bf16 in-kernel temps,
    # with the (double-buffered) resident wmat taken off the top.
    usable = budget - 2 * C * C * w_bytes
    per_col = C * (4 * io_bytes + 20)
    cap_budget = max(usable, 0) // max(per_col, 1)
    # Byte-target cap that scales with C (keeps blocks ~0.5-2 MiB, not a flat 2048).
    cap_bytes = max(_LANE, _TARGET_SLAB_BYTES // max(C * io_bytes, 1))
    cap = min(cap_budget, cap_bytes)
    cap = max(_LANE, (cap // _LANE) * _LANE)
    # Balanced split: near-equal tiles instead of rounding the extent up to a full tile.
    n_lane = _cdiv(hw128, cap)
    # Ensure enough grid steps for DMA/compute overlap, while keeping tiles >= 512 lanes.
    if N * n_lane < _MIN_TOTAL_STEPS:
        want = _cdiv(_MIN_TOTAL_STEPS, max(N, 1))
        n_lane = max(n_lane, min(want, max(1, hw128 // _MIN_FORCED_TILE)))
    tile = _round_up(_cdiv(hw128, n_lane), _LANE)
    if tile >= HW:
        tile = HW                   # full extent is always a legal block dim
    return tile


def _batch_block(N, C, tile, io_bytes, lane_steps):
    """How many batch samples to merge into one block (keeps DMAs ~1 MiB)."""
    per_sample = C * tile * io_bytes
    nb = max(1, min(N, _NB_MAX, _TARGET_BLOCK_BYTES // max(per_sample, 1)))
    if nb > 1:
        # Don't merge the batch so far that the pipeline runs out of grid steps.
        nb = max(1, min(nb, (N * lane_steps) // _MIN_TOTAL_STEPS))
    return nb


def _neg_pow(y, beta):
    """y ** (-beta) for y >= 1; cheap EUP sequences for common betas, pow fallback."""
    if beta == 0.0:
        return jnp.ones_like(y)
    if beta == 1.0:
        return 1.0 / y
    if beta == 2.0:
        r = 1.0 / y
        return r * r
    if beta == 0.5:
        return lax.rsqrt(y)
    if beta == 0.75:
        r = lax.rsqrt(y)            # y^-1/2
        return r * jnp.sqrt(r)      # * y^-1/4
    if beta == 1.5:
        return lax.rsqrt(y) / y
    return y ** (-beta)             # generic fallback (log+exp on the EUP)


def _divnorm_kernel(w_ref, x_ref, o_ref, *, beta, k_neg_beta, matmul_dtype):
    # w_ref: (C, C), prescaled by alpha/lamb.  x_ref / o_ref: (NB, C, TILE).
    w = w_ref[...]
    nb = x_ref.shape[0]             # static; small by construction (<= _NB_MAX)
    for n in range(nb):             # static unroll over the batch sub-block
        x = x_ref[n].astype(jnp.float32)            # (C, TILE)
        x2 = x * x
        # Channel-wise exponential-kernel conv == (C, C) @ (C, TILE) on the MXU.
        s = jnp.dot(w, x2.astype(matmul_dtype),
                    preferred_element_type=jnp.float32)
        # Fused epilogue: out = x^2 * (1 + alpha/lamb * conv)^(-beta) * k^(-beta).
        o_ref[n] = (x2 * _neg_pow(1.0 + s, beta) * k_neg_beta).astype(o_ref.dtype)


def divisive_normalization_kenmiller(x_nchw, lamb=5.0, alpha=5.0, beta=0.75,
                                     k=1.0, matmul_dtype=jnp.bfloat16):
    """Pallas implementation of divisive_normalization_kenmiller (4D NCHW case)."""
    if x_nchw.ndim != 4:
        # TODO(synk): the reference's 3D avg_pool branch calls avg_pool2d with an
        # invalid signature (broken upstream); only the 4D conv3d path is ported.
        raise ValueError("expected 4D NCHW input, got %dD" % x_nchw.ndim)

    # NaN fallbacks from the reference implementation (static / trace-time).
    if math.isnan(lamb):
        lamb = 5.0
    if math.isnan(alpha):
        alpha = 0.1
    if math.isnan(beta):
        beta = 1.0
    if math.isnan(k):
        k = 1.0
    lamb, alpha, beta, k = float(lamb), float(alpha), float(beta), float(k)
    if k <= 0.0 or alpha < 0.0:
        # Fractional power of a non-positive base would silently yield NaNs
        # (the PyTorch reference has the same failure mode).
        raise ValueError(f"divisive norm requires k > 0 and alpha >= 0 "
                         f"(got k={k}, alpha={alpha})")

    neighbors = int(math.ceil(2 * 4 * lamb))
    if neighbors % 2 == 0:
        neighbors += 1
    half = neighbors // 2

    N, C, H, W = x_nchw.shape
    HW = H * W
    k_neg_beta = k ** (-beta)

    # Mixing matrix Wm[c,c'] = (alpha/lamb) * exp(-|c-c'|/lamb) for |c-c'| <= half.
    offs = jnp.arange(C)
    dist = jnp.abs(offs[:, None] - offs[None, :]).astype(jnp.float32)
    wmat_f32 = jnp.where(dist <= half, jnp.exp(-dist / lamb) * (alpha / lamb), 0.0)

    io_bytes = jnp.dtype(x_nchw.dtype).itemsize
    w_bytes = jnp.dtype(matmul_dtype).itemsize
    budget, vmem_limit = _vmem_params()

    x3 = x_nchw.reshape(N, C, HW)

    if 2 * C * C * w_bytes > budget // 2:
        # TODO(synk): band-blocked channel tiling (bandwidth = 2*half+1) would keep
        # very large C on the MXU with a small weight footprint; fall back to plain
        # XLA here to avoid a VMEM OOM from the dense resident (C, C) matrix.
        x2 = x3.astype(jnp.float32) ** 2
        s = jnp.einsum('cd,ndk->nck', wmat_f32, x2)
        out = (x2 * _neg_pow(1.0 + s, beta) * k_neg_beta).astype(x_nchw.dtype)
        return out.reshape(N, C, H, W)

    wmat = wmat_f32.astype(matmul_dtype)

    tile = _lane_tile(HW, C, N, io_bytes, w_bytes, budget)
    lane_steps = _cdiv(HW, tile)
    nb = _batch_block(N, C, tile, io_bytes, lane_steps)
    batch_steps = _cdiv(N, nb)

    kernel = functools.partial(_divnorm_kernel, beta=beta,
                               k_neg_beta=k_neg_beta, matmul_dtype=matmul_dtype)

    # No padding / transposes: ragged last blocks (lane and batch) are clamped on
    # read and masked on write by the Pallas pipeline; garbage stays per-lane and
    # per-sample, so it never contaminates valid outputs.
    out3 = pl.pallas_call(
        kernel,
        out_shape=jax.ShapeDtypeStruct((N, C, HW), x_nchw.dtype),
        grid_spec=pltpu.PrefetchScalarGridSpec(
            num_scalar_prefetch=0,
            grid=(batch_steps, lane_steps),
            in_specs=[
                # TODO(synk): single-buffer wmat (pipeline_mode=pl.Buffered(1)) to
                # halve its VMEM footprint on v7x for large C.
                pl.BlockSpec((C, C), lambda b, t: (0, 0)),            # wmat (resident)
                pl.BlockSpec((nb, C, tile), lambda b, t: (b, 0, t)),  # x
            ],
            out_specs=pl.BlockSpec((nb, C, tile), lambda b, t: (b, 0, t)),
        ),
        compiler_params=pltpu.CompilerParams(
            dimension_semantics=("parallel", "parallel"),
            vmem_limit_bytes=vmem_limit),
    )(wmat, x3)

    return out3.reshape(N, C, H, W)


class DivisiveNormKenMiller:
    """JAX/Pallas port of the PyTorch module (parameters are static scalars)."""

    def __init__(self, args_divnorm):
        self.lamb = float(args_divnorm['lamb'])
        self.alpha = float(args_divnorm['alpha'])
        self.beta = float(args_divnorm['beta'])
        self.k = float(args_divnorm['k'])
        # TODO(synk): 'fix_all' (requires_grad toggling) has no inference-time effect.

    def __call__(self, x):
        return divisive_normalization_kenmiller(
            x, self.lamb, self.alpha, self.beta, self.k)


def _reference(x, lamb, alpha, beta, k):
    """Plain-JAX fp32 reference mirroring the PyTorch math (for a sanity check)."""
    neighbors = int(math.ceil(2 * 4 * lamb))
    if neighbors % 2 == 0:
        neighbors += 1
    half = neighbors // 2
    N, C, H, W = x.shape
    x2 = x.astype(jnp.float32) ** 2
    offs = jnp.arange(C)
    dist = jnp.abs(offs[:, None] - offs[None, :]).astype(jnp.float32)
    wmat = jnp.where(dist <= half, jnp.exp(-dist / lamb), 0.0)
    div = jnp.einsum('cd,ndhw->nchw', wmat, x2)
    div = div / lamb
    div = ((div * alpha + 1.0) * k) ** beta
    return x2 / div


if __name__ == "__main__":
    args_divnorm = {'lamb': 5.0, 'alpha': 5.0, 'beta': 0.75, 'k': 1.0,
                    'fix_all': True}
    module = DivisiveNormKenMiller(args_divnorm)
    key = jax.random.PRNGKey(0)

    # Small NCHW input (128-aligned lane extent, single lane step).
    x = jax.random.normal(key, (2, 4, 16, 16), dtype=jnp.float32)
    out = jax.block_until_ready(module(x))
    ref = _reference(x, args_divnorm['lamb'], args_divnorm['alpha'],
                     args_divnorm['beta'], args_divnorm['k'])
    assert out.shape == x.shape
    assert jnp.allclose(out, ref, rtol=1e-2, atol=1e-4), \
        "mismatch vs reference (small-HW path, bf16 matmul)"

    # Larger HW with N > 1 -> multiple lane tiles, batch in the grid.
    xb = jax.random.normal(jax.random.PRNGKey(0), (2, 4, 32, 32), dtype=jnp.float32)
    outb = jax.block_until_ready(module(xb))
    refb = _reference(xb, args_divnorm['lamb'], args_divnorm['alpha'],
                      args_divnorm['beta'], args_divnorm['k'])
    assert jnp.allclose(outb, refb, rtol=1e-2, atol=1e-4), \
        "mismatch vs reference (batched, multi-tile path, bf16 matmul)"

    # Non-128-multiple spatial extent -> exercises the ragged (unpadded) last tile.
    xr = jax.random.normal(jax.random.PRNGKey(0), (1, 8, 33, 33), dtype=jnp.float32)
    outr = jax.block_until_ready(module(xr))
    refr = _reference(xr, args_divnorm['lamb'], args_divnorm['alpha'],
                      args_divnorm['beta'], args_divnorm['k'])
    assert jnp.allclose(outr, refr, rtol=1e-2, atol=1e-4), \
        "mismatch vs reference (ragged lane-tile path, bf16 matmul)"

    # fp32 matmul path at tight tolerance (validates the fused rsqrt epilogue).
    out32 = jax.block_until_ready(
        divisive_normalization_kenmiller(x, 5.0, 5.0, 0.75, 1.0,
                                         matmul_dtype=jnp.float32))
    assert jnp.allclose(out32, ref, rtol=2e-3, atol=1e-5), \
        "mismatch vs reference (fp32 matmul path)"

    print("KERNEL_OK")
</pallas_src>

<mosaic_0001>
module attributes {stable_mosaic.version = 11 : i64} {
  func.func @_divnorm_kernel(%arg0: i32, %arg1: i32, %arg2: memref<4x4xbf16, #tpu.memory_space<vmem>>, %arg3: memref<1x4x256xf32, #tpu.memory_space<vmem>>, %arg4: memref<1x4x256xf32, #tpu.memory_space<vmem>>) attributes {dimension_semantics = [#tpu.dimension_semantics<parallel>, #tpu.dimension_semantics<parallel>], iteration_bounds = array<i64: 2, 1>, scalar_prefetch = 0 : i64, scratch_operands = 0 : i64, tpu.core_type = #tpu.core_type<tc>, window_params = [{pipeline_mode = #tpu.pipeline_mode<synchronous>, transform_indices = @transform_0, window_bounds = array<i64: 4, 4>}, {transform_indices = @transform_1, window_bounds = array<i64: 1, 4, 256>}, {transform_indices = @transform_2, window_bounds = array<i64: 1, 4, 256>}]} {
    %c0 = arith.constant 0 : index
    %c0_0 = arith.constant 0 : index
    %0 = vector.load %arg2[%c0, %c0_0] : memref<4x4xbf16, #tpu.memory_space<vmem>>, vector<4x4xbf16>
    %c0_1 = arith.constant 0 : index
    %c0_2 = arith.constant 0 : index
    %c0_3 = arith.constant 0 : index
    %1 = vector.load %arg3[%c0_1, %c0_2, %c0_3] : memref<1x4x256xf32, #tpu.memory_space<vmem>>, vector<1x4x256xf32>
    %2 = vector.shape_cast %1 : vector<1x4x256xf32> to vector<4x256xf32>
    %3 = arith.mulf %2, %2 : vector<4x256xf32>
    %4 = arith.truncf %3 : vector<4x256xf32> to vector<4x256xbf16>
    %cst = arith.constant dense<0.000000e+00> : vector<4x256xf32>
    %5 = tpu.matmul %0, %4, %cst {dimension_numbers = #tpu.dot_dimension_numbers<[1], [0], [0], [1], [0, 0, 1, 1], [], []>} : vector<4x4xbf16>, vector<4x256xbf16>, vector<4x256xf32> -> vector<4x256xf32>
    %cst_4 = arith.constant 1.000000e+00 : f32
    %6 = vector.broadcast %cst_4 : f32 to vector<4x256xf32>
    %7 = arith.addf %6, %5 : vector<4x256xf32>
    %8 = math.rsqrt %7 : vector<4x256xf32>
    %9 = math.sqrt %8 : vector<4x256xf32>
    %10 = arith.mulf %8, %9 : vector<4x256xf32>
    %11 = arith.mulf %3, %10 : vector<4x256xf32>
    %cst_5 = arith.constant 1.000000e+00 : f32
    %12 = vector.broadcast %cst_5 : f32 to vector<4x256xf32>
    %13 = arith.mulf %11, %12 : vector<4x256xf32>
    %c0_6 = arith.constant 0 : index
    %c0_7 = arith.constant 0 : index
    %c0_8 = arith.constant 0 : index
    %14 = vector.load %arg4[%c0_6, %c0_7, %c0_8] : memref<1x4x256xf32, #tpu.memory_space<vmem>>, vector<1x4x256xf32>
    %15 = vector.shape_cast %14 : vector<1x4x256xf32> to vector<4x256xf32>
    %16 = vector.shape_cast %13 : vector<4x256xf32> to vector<1x4x256xf32>
    tpu.vector_store %arg4[%c0_6, %c0_7, %c0_8], %16 {strides = array<i32>} : memref<1x4x256xf32, #tpu.memory_space<vmem>>, vector<1x4x256xf32>,
    return
  }
  func.func @transform_0(%arg0: i32, %arg1: i32) -> (i32, i32) {
    %c0_i32 = arith.constant 0 : i32
    %c0_i32_0 = arith.constant 0 : i32
    %c0_i32_1 = arith.constant 0 : i32
    return %c0_i32, %c0_i32_0 : i32, i32
  }
  func.func @transform_1(%arg0: i32, %arg1: i32) -> (i32, i32, i32) {
    %c0_i32 = arith.constant 0 : i32
    %c0_i32_0 = arith.constant 0 : i32
    return %arg0, %c0_i32, %arg1 : i32, i32, i32
  }
  func.func @transform_2(%arg0: i32, %arg1: i32) -> (i32, i32, i32) {
    %c0_i32 = arith.constant 0 : i32
    %c0_i32_0 = arith.constant 0 : i32
    return %arg0, %c0_i32, %arg1 : i32, i32, i32
  }
}

</mosaic_0001>

<llo_original>
// kernel: tpu_custom_call.1
$region0: #{tpu_custom_call.1}
  #allocation0 [shape = 'u32[]', space=smem, size = 0x4, offset = 0x4, fixed_abs, tag = 'smem constant byte address 0x4 - core index']
  #allocation1 [shape = 'u32[72,128]{1,0:T(1,128)}', space=vmem, size = 0x9000, scoped, tag = 'internal scratch']
  %s0 = inlined_call_operand.hbm [shape: bf16[4,4], index: 0, kind: input, shape index: {}]
  %s1 = inlined_call_operand.hbm [shape: f32[2,4,256], index: 1, kind: input, shape index: {}]
  %s2 = inlined_call_operand.hbm [shape: f32[2,4,256], index: 2, kind: output, shape index: {}]
  %s3 = sld [smem:[#allocation0]]
  $region49: #{tpu_custom_call.1} parent=0
    _
  %s5 = ssub.s32 1, %s3
  %s6 = scalar_select 0, %s5, %s3
  $region1: #{tpu_custom_call.1} parent=0
    #allocation2 [shape = 'u8[1024]{0}', space=vmem, size = 0x400, scoped, tag = 'input window, operand 0, single buffered']
    #allocation3 [shape = 's32[2]{0}', space=sflag, size = 0x8, scoped, tag = 'scoped memory for tpu_custom_call.1']
    #allocation4 [shape = 's32[2]{0}', space=sflag, size = 0x8, scoped, tag = 'scoped memory for tpu_custom_call.1']
    #allocation5 [shape = 'u8[8192]{0}', space=vmem, size = 0x2000, scoped, tag = 'input window, operand 1']
    #allocation6 [shape = 's32[2]{0}', space=sflag, size = 0x8, scoped, tag = 'scoped memory for tpu_custom_call.1']
    #allocation7 [shape = 'u8[8192]{0}', space=vmem, size = 0x2000, scoped, tag = 'output window, operand 0']
    %7 = vsyncpa [#allocation3], 0
    %8 = vsyncpa [#allocation6], 0
    %s9 = scalar_lea.sflag [#allocation6], 1
    %10 = vsyncpa %s9, 0
    %11 = vsyncpa [#allocation4], 0
    %s12 = scalar_lea.sflag [#allocation4], 1
    %13 = vsyncpa %s12, 0
    loop: start=0, step=1, limit=4
    $region2: #{tpu_custom_call.1} parent=1 // loop_pre_header
      _
    $region3: #{tpu_custom_call.1} parent=1 // loop_header
      %s15 = sphi 0, %s19
      %p16 = scmp.ge.s32.totalorder %s15, 4
      %s22 = sphi 0, %s34
      %s23 = sphi 0, %s30
      %s24 = sphi 0, %s22
      %s25 = sphi 0, %s23
      %s26 = sphi 0, %s24
      %s27 = sphi 0, %s25
      %s35 = sphi 0, %s35
      %s37 = sphi 0, %s35
      %s38 = sphi 0, %s37
      %s52 = sphi 0, %s38
      %s60 = sphi 0, %s62
      %s63 = sphi 0, %s60
      %s64 = sphi 0, %s63
      %s80 = sphi 0, %s64
      %s88 = sphi 0, %s90
      %s91 = sphi 0, %s88
      %s92 = sphi 0, %s91
      %s108 = sphi 0, %s92
    $region4: #{tpu_custom_call.1} parent=1 // loop_header_branch
      %18 = sbr.rel (%p16) target = $region8
    $region5: #{tpu_custom_call.1} parent=1 // loop_body
      %s20 = ssub.s32 %s15, 1
      %s21 = ssub.s32 %s15, 2
      %s28 = sadd.s32 1, %s23
      %p29 = scmp.ge.s32.totalorder %s28, 1
      %s30 = scalar_select %p29, 0, %s28
      %s31 = sadd.s32 1, %s22
      %s32 = scalar_select %p29, %s31, %s22
      %p33 = scmp.ge.s32.totalorder %s32, 2
      %s34 = scalar_select %p33, 0, %s32
      %s36 = sadd.s32 %s35, 1
      %p39 = scmp.eq.s32.totalorder %s15, 1
      %p40 = scmp.ne.s32.totalorder %s35, %s37
      %p41 = scmp.eq.s32.totalorder %s15, 0
      %p42 = por %p40, %p41
      %p43 = scmp.ne.s32.totalorder %s35, %s37
      %p44 = scmp.eq.s32.totalorder %s20, 1
      %p45 = por %p43, %p44
      %p46 = scmp.ne.s32.totalorder %s37, %s38
      %p47 = scmp.eq.s32.totalorder %s20, 0
      %p48 = por %p46, %p47
      %p49 = scmp.ne.s32.totalorder %s37, %s38
      %p50 = scmp.eq.s32.totalorder %s21, 1
      %p51 = por %p49, %p50
      %p53 = scmp.ne.s32.totalorder %s38, %s52
      %p54 = scmp.eq.s32.totalorder %s21, 0
      %p55 = por %p53, %p54
      %s56 = ssub.s32 %s22, %s34
      %s57 = ssub.s32 %s23, %s30
      %s58 = sor.u32 %s56, %s57
      %p59 = scmp.eq.s32.totalorder %s58, 0
      %s61 = sadd.s32 %s60, 1
      %s62 = scalar_select %p59, %s60, %s61
      %p65 = pneg %p59
      %p66 = scmp.eq.s32.totalorder %s15, 1
      %p67 = por %p65, %p66
      %p68 = scmp.ne.s32.totalorder %s60, %s63
      %p69 = scmp.eq.s32.totalorder %s15, 0
      %p70 = por %p68, %p69
      %p71 = scmp.ne.s32.totalorder %s60, %s63
      %p72 = scmp.eq.s32.totalorder %s20, 1
      %p73 = por %p71, %p72
      %p74 = scmp.ne.s32.totalorder %s63, %s64
      %p75 = scmp.eq.s32.totalorder %s20, 0
      %p76 = por %p74, %p75
      %p77 = scmp.ne.s32.totalorder %s63, %s64
      %p78 = scmp.eq.s32.totalorder %s21, 1
      %p79 = por %p77, %p78
      %p81 = scmp.ne.s32.totalorder %s64, %s80
      %p82 = scmp.eq.s32.totalorder %s21, 0
      %p83 = por %p81, %p82
      %s84 = ssub.s32 %s22, %s34
      %s85 = ssub.s32 %s23, %s30
      %s86 = sor.u32 %s84, %s85
      %p87 = scmp.eq.s32.totalorder %s86, 0
      %s89 = sadd.s32 %s88, 1
      %s90 = scalar_select %p87, %s88, %s89
      %p93 = pneg %p87
      %p94 = scmp.eq.s32.totalorder %s15, 1
      %p95 = por %p93, %p94
      %p96 = scmp.ne.s32.totalorder %s88, %s91
      %p97 = scmp.eq.s32.totalorder %s15, 0
      %p98 = por %p96, %p97
      %p99 = scmp.ne.s32.totalorder %s88, %s91
      %p100 = scmp.eq.s32.totalorder %s20, 1
      %p101 = por %p99, %p100
      %p102 = scmp.ne.s32.totalorder %s91, %s92
      %p103 = scmp.eq.s32.totalorder %s20, 0
      %p104 = por %p102, %p103
      %p105 = scmp.ne.s32.totalorder %s91, %s92
      %p106 = scmp.eq.s32.totalorder %s21, 1
      %p107 = por %p105, %p106
      %p109 = scmp.ne.s32.totalorder %s92, %s108
      %p110 = scmp.eq.s32.totalorder %s21, 0
      %p111 = por %p109, %p110
      %p112 = scmp.le.s32.totalorder 1, %s15
      %p113 = scmp.lt.s32.totalorder %s15, 3
      %p114 = pnand %p112, %p113
      %p115 = pneg %p114
      // Predicated region
      $region9: #{tpu_custom_call.1} parent=5 // pred_check
        _
      $region10: #{tpu_custom_call.1} parent=5 // pred_check_branch
        %117 = sbr.rel (%p114) target = $region12
      $region11: #{tpu_custom_call.1} parent=5 // pred_region
        %s118 = ssub.s32 %s15, 1
        // Predicated region
        $region13: #{tpu_custom_call.1} parent=11 // pred_check
          %p119 = pneg %p48
        $region14: #{tpu_custom_call.1} parent=11 // pred_check_branch
          %121 = sbr.rel (%p119) target = $region16
        $region15: #{tpu_custom_call.1} parent=11 // pred_region
          %123 = vsyncadd [#allocation3], 0
          %s125 = sshll.u32 %s0, 4
          %s126 = int_to_ptr.hbm [resolvable:$true] %s125
          %s127 = sshll.u32 [#allocation2], 4
          %s128 = int_to_ptr.vmem [resolvable:$true] %s127
          %130 = dma.hbm_to_vmem [thread:$0]  %s126, 32, %s128, [#allocation3]
        $region16: #{tpu_custom_call.1} parent=11 // pred_fallthru
          _
      $region12: #{tpu_custom_call.1} parent=5 // pred_fallthru
        _
      %p131 = scmp.lt.s32.totalorder %s15, 2
      // Predicated region
      $region17: #{tpu_custom_call.1} parent=5 // pred_check
        %p132 = pneg %p131
      $region18: #{tpu_custom_call.1} parent=5 // pred_check_branch
        %134 = sbr.rel (%p132) target = $region20
      $region19: #{tpu_custom_call.1} parent=5 // pred_region
        // Predicated region
        $region21: #{tpu_custom_call.1} parent=19 // pred_check
          %p135 = pneg %p70
        $region22: #{tpu_custom_call.1} parent=19 // pred_check_branch
          %137 = sbr.rel (%p135) target = $region24
        $region23: #{tpu_custom_call.1} parent=19 // pred_region
          %s138 = sand.u32 %s60, 1
          %s139 = scalar_lea.sflag [#allocation6], %s138
          %s140 = sand.u32 %s60, 1
          %s141 = smul.addr %s140, 8
          %s142 = scalar_lea.vmem [#allocation5], %s141
          %s143 = smul.u32 2, %s23
          %145 = vsyncadd %s139, 0
          %s146 = smul.addr %s22, 2
          %s147 = sadd.s32 %s143, %s146
          %s148 = smul.addr %s147, 4
          %s149 = scalar_lea.hbm %s1, %s148
          %s151 = sshll.u32 %s149, 4
          %s152 = int_to_ptr.hbm [resolvable:$true] %s151
          %s153 = sshll.u32 %s142, 4
          %s154 = int_to_ptr.vmem [resolvable:$true] %s153
          %156 = dma.hbm_to_vmem [thread:$0]  %s152, 128, %s154, %s139
        $region24: #{tpu_custom_call.1} parent=19 // pred_fallthru
          _
      $region20: #{tpu_custom_call.1} parent=5 // pred_fallthru
        _
      %p157 = scmp.le.s32.totalorder 1, %s15
      %p158 = scmp.lt.s32.totalorder %s15, 3
      %p159 = pnand %p157, %p158
      %p160 = pneg %p159
      // Predicated region
      $region25: #{tpu_custom_call.1} parent=5 // pred_check
        _
      $region26: #{tpu_custom_call.1} parent=5 // pred_check_branch
        %162 = sbr.rel (%p159) target = $region28
      $region27: #{tpu_custom_call.1} parent=5 // pred_region
        %s163 = ssub.s32 %s15, 1
        // Predicated region
        $region29: #{tpu_custom_call.1} parent=27 // pred_check
          %p164 = pneg %p48
        $region30: #{tpu_custom_call.1} parent=27 // pred_check_branch
          %166 = sbr.rel (%p164) target = $region32
        $region31: #{tpu_custom_call.1} parent=27 // pred_region
          %168 = dma.done [#allocation3], 32
        $region32: #{tpu_custom_call.1} parent=27 // pred_fallthru
          _
        %s169 = sand.u32 %s63, 1
        %s170 = scalar_lea.sflag [#allocation6], %s169
        %s171 = sand.u32 %s63, 1
        %s172 = smul.addr %s171, 8
        %s173 = scalar_lea.vmem [#allocation5], %s172
        // Predicated region
        $region33: #{tpu_custom_call.1} parent=27 // pred_check
          %p174 = pneg %p76
        $region34: #{tpu_custom_call.1} parent=27 // pred_check_branch
          %176 = sbr.rel (%p174) target = $region36
        $region35: #{tpu_custom_call.1} parent=27 // pred_region
          %178 = dma.done %s170, 128
        $region36: #{tpu_custom_call.1} parent=27 // pred_fallthru
          _
        %p179 = pneg %p48
        %p180 = pneg %p45
        %s181 = sand.u32 %s63, 1
        %s182 = scalar_lea.sflag [#allocation6], %s181
        %s183 = sand.u32 %s63, 1
        %s184 = smul.addr %s183, 8
        %s185 = scalar_lea.vmem [#allocation5], %s184
        %p186 = pneg %p76
        %p187 = pneg %p73
        %p188 = pneg %p104
        %p189 = pneg %p101
        %s190 = sand.u32 %s91, 1
        %s191 = scalar_lea.sflag [#allocation4], %s190
        %s192 = sand.u32 %s91, 1
        %s193 = smul.addr %s192, 8
        %s194 = scalar_lea.vmem [#allocation7], %s193
        %s195 = smul.u32 2, %s25
        %s196 = smul.u32 2, %s25
        %v198 = vld [vmem:[#allocation2] sm:$0x3]
        %v199 = vld [vmem:[%s173] sm:$0xff]
        %v200 = vmul.f32 %v199, %v199
        %202 = vst [vmem:[#allocation1] ss:$2 sm:$0xff] %v200
        %v203 = vld.sshfl [vmem:[#allocation1] sm:$0xff pattern:$0x75316420]
        %v204 = vld.sshfl [vmem:[#allocation1 + $0x8] sm:$0xff pattern:$0x75316420]
        %v207 = vpack.c.bf16 %v203, %v203
        %v208 = vpack.c.bf16 %v204, %v204
        %vm209 = vcmask 31744
        %v211 = vsel %vm209, %v198, 0
        %vm213 = vcmask 1041408
        %v215 = vsel %vm213, %v207, 0
        %v218 = vsel %vm213, %v208, 0
        %220 = vmatpush.bf16.msra.mxu0 0
        %221 = vmatpush.bf16.msra.mxu0 0
        %222 = vmatpush.bf16.msra.mxu0 0
        %223 = vmatpush.bf16.msra.mxu0 0
        %224 = vmatpush.bf16.msra.mxu0 0
        %225 = vmatpush.bf16.msra.mxu0 0
        %226 = vmatpush.bf16.msra.mxu0 0
        %227 = vmatpush.bf16.msra.mxu0 %v215
        %228 = vmatmul.bf16.gmra.mxu0 %v211
        %v229 = vpop.f32.mrf.mxu0
        %v230 = vadd.f32 1.0, %v229
        %v231 = vpop.f32.mrf.mxu0
        %232 = vdwg.mxu0
        %233 = vmatpush.bf16.msra.mxu0 0
        %234 = vmatpush.bf16.msra.mxu0 0
        %235 = vmatpush.bf16.msra.mxu0 0
        %236 = vmatpush.bf16.msra.mxu0 0
        %237 = vmatpush.bf16.msra.mxu0 0
        %238 = vmatpush.bf16.msra.mxu0 0
        %239 = vmatpush.bf16.msra.mxu0 0
        %240 = vmatpush.bf16.msra.mxu0 %v218
        %241 = vmatmul.bf16.gmra.mxu0 %v211
        %v242 = vpop.f32.mrf.mxu0
        %v243 = vadd.f32 1.0, %v242
        %v244 = vpop.f32.mrf.mxu0
        %245 = vdwg.mxu0
        %v246 = vrsqrt.pop %v230
        %v247 = vmul.f32 %v246, %v230
        %v248 = vmul.f32 %v247, %v246
        %v249 = vmul.f32 0.5, %v248
        %v250 = vsub.f32 1.5, %v249
        %v251 = vmul.f32 %v246, %v250
        %vm252 = vweird.f32 %v230
        %vm253 = vweird.f32 %v246
        %vm254 = vmor %vm252, %vm253
        %v255 = vsel %vm254, %v246, %v251
        %v256 = vrsqrt.pop %v243
        %v257 = vmul.f32 %v256, %v243
        %v258 = vmul.f32 %v257, %v256
        %v259 = vmul.f32 0.5, %v258
        %v260 = vsub.f32 1.5, %v259
        %v261 = vmul.f32 %v256, %v260
        %vm262 = vweird.f32 %v243
        %vm263 = vweird.f32 %v256
        %vm264 = vmor %vm262, %vm263
        %v265 = vsel %vm264, %v256, %v261
        %v266 = vrsqrt.pop %v255
        %v267 = vmul.f32 %v266, %v255
        %v268 = vmul.f32 %v267, %v266
        %v269 = vmul.f32 0.5, %v268
        %v270 = vsub.f32 1.5, %v269
        %v271 = vmul.f32 %v266, %v270
        %v272 = vmul.f32 %v255, %v271
        %vm273 = vcmp.eq.f32.partialorder %v255, inf
        %v274 = vsel %vm273, %v255, %v272
        %vm275 = vcmp.eq.f32.partialorder %v255, 0.0
        %v276 = vand.u32 %v255, 2147483648
        %v277 = vsel %vm275, %v276, %v274
        %v278 = vrsqrt.pop %v265
        %v279 = vmul.f32 %v278, %v265
        %v280 = vmul.f32 %v279, %v278
        %v281 = vmul.f32 0.5, %v280
        %v282 = vsub.f32 1.5, %v281
        %v283 = vmul.f32 %v278, %v282
        %v284 = vmul.f32 %v265, %v283
        %vm285 = vcmp.eq.f32.partialorder %v265, inf
        %v286 = vsel %vm285, %v265, %v284
        %vm287 = vcmp.eq.f32.partialorder %v265, 0.0
        %v288 = vand.u32 %v265, 2147483648
        %v289 = vsel %vm287, %v288, %v286
        %v290 = vmul.f32 %v255, %v277
        %v291 = vmul.f32 %v265, %v289
        %v294 = vrot.slane %v291, 4
        %vm295 = vcmask 1043456
        %v296 = vsel %vm295, %v290, %v294
        %v298 = vmul.f32 %v200, %v296
        %299 = vst [vmem:[%s194] sm:$0xff] %v298
        %s300 = sand.u32 %s91, 1
        %s301 = scalar_lea.sflag [#allocation4], %s300
        %s302 = sand.u32 %s91, 1
        %s303 = smul.addr %s302, 8
        %s304 = scalar_lea.vmem [#allocation7], %s303
        // Predicated region
        $region37: #{tpu_custom_call.1} parent=27 // pred_check
          %p305 = pneg %p101
        $region38: #{tpu_custom_call.1} parent=27 // pred_check_branch
          %307 = sbr.rel (%p305) target = $region40
        $region39: #{tpu_custom_call.1} parent=27 // pred_region
          %s308 = smul.u32 2, %s25
          %310 = vsyncadd %s301, 0
          %s311 = smul.addr %s24, 2
          %s312 = sadd.s32 %s308, %s311
          %s313 = smul.addr %s312, 4
          %s314 = scalar_lea.hbm %s2, %s313
          %s316 = sshll.u32 %s304, 4
          %s317 = int_to_ptr.vmem [resolvable:$true] %s316
          %s318 = sshll.u32 %s314, 4
          %s319 = int_to_ptr.hbm [resolvable:$true] %s318
          %321 = dma.vmem_to_hbm [thread:$0]  %s317, 128, %s319, %s301
        $region40: #{tpu_custom_call.1} parent=27 // pred_fallthru
          _
      $region28: #{tpu_custom_call.1} parent=5 // pred_fallthru
        _
      %p322 = scmp.le.s32.totalorder 2, %s15
      // Predicated region
      $region41: #{tpu_custom_call.1} parent=5 // pred_check
        %p323 = pneg %p322
      $region42: #{tpu_custom_call.1} parent=5 // pred_check_branch
        %325 = sbr.rel (%p323) target = $region44
      $region43: #{tpu_custom_call.1} parent=5 // pred_region
        %s326 = ssub.s32 %s15, 2
        // Predicated region
        $region45: #{tpu_custom_call.1} parent=43 // pred_check
          %p327 = pneg %p107
        $region46: #{tpu_custom_call.1} parent=43 // pred_check_branch
          %329 = sbr.rel (%p327) target = $region48
        $region47: #{tpu_custom_call.1} parent=43 // pred_region
          %s330 = sand.u32 %s92, 1
          %s331 = scalar_lea.sflag [#allocation4], %s330
          %s332 = sand.u32 %s92, 1
          %s333 = smul.addr %s332, 8
          %s334 = scalar_lea.vmem [#allocation7], %s333
          %336 = dma.done %s331, 128
        $region48: #{tpu_custom_call.1} parent=43 // pred_fallthru
          _
      $region44: #{tpu_custom_call.1} parent=5 // pred_fallthru
        _
    $region6: #{tpu_custom_call.1} parent=1 // loop_footer
      %s19 = sadd.s32 1, %s15
    $region7: #{tpu_custom_call.1} parent=1 // loop_footer_branch
      %14 = sbr.rel target = $region3
    $region8: #{tpu_custom_call.1} parent=1 // loop_exit
      _
    %337 = vsyncpa [#allocation3], 1
    %s338 = scalar_lea.sflag [#allocation3], 1
    %339 = vsyncpa %s338, 1
    %340 = vsyncpa [#allocation6], 1
    %s341 = scalar_lea.sflag [#allocation6], 1
    %342 = vsyncpa %s341, 1
    %343 = vsyncpa [#allocation4], 1
    %s344 = scalar_lea.sflag [#allocation4], 1
    %345 = vsyncpa %s344, 1

</llo_original>
